<compile_context>
chip_gen: v7x
topology: tpu7x:2x2x1
jax: 0.10.0
libtpu: 0.0.40
codegen_flags: <defaults>
</compile_context>

<pallas_src>
import numpy as np
import jax
import jax.numpy as jnp
from jax.experimental import pallas as pl
from jax.experimental.pallas import tpu as pltpu


def positional_encoding(length, depth):
    """NumPy port of the reference positional_encoding (float32), shape (L, D)."""
    original_depth = depth
    if depth % 2 != 0:
        depth += 1
    depth = depth / 2
    positions = np.arange(length)[:, np.newaxis]                 # (L, 1)
    depths = np.arange(depth)[np.newaxis, :] / depth             # (1, d/2)
    angle_rads = positions / 10000 ** depths                     # (L, d/2)
    pos_encoding = np.concatenate(
        [np.sin(angle_rads), np.cos(angle_rads)], axis=-1)[:, :original_depth]
    return pos_encoding.astype(np.float32)


# --------------------------------------------------------------------------
# Kernel A: tiny, runs once.  Computes the FFN of the positional encoding in
# transposed form so its output is already (D, S) and no transpose of x (or of
# the FFN result) is ever needed.
#   add_T = w2^T @ relu(w1^T @ pe^T + b1) + b2          shape (D, S)
# --------------------------------------------------------------------------
def _ffn_kernel(pe_t_ref, w1t_ref, b1t_ref, w2t_ref, b2t_ref, add_t_ref):
    # pe_t: (D, S)  w1t: (H, D)  b1t: (H, 1)  w2t: (D, H)  b2t: (D, 1)
    h = jnp.dot(w1t_ref[...], pe_t_ref[...],
                preferred_element_type=jnp.float32)              # (H, S)
    h = jnp.maximum(h + b1t_ref[...], 0.0)                       # ReLU, lane bcast
    add_t = jnp.dot(w2t_ref[...], h,
                    preferred_element_type=jnp.float32)          # (D, S)
    add_t_ref[...] = add_t + b2t_ref[...]                        # lane bcast


# --------------------------------------------------------------------------
# Kernel B: the hot path.  Pure tiled broadcast-add in the native (B, D, S)
# layout; the add_T tile stays resident in VMEM across the inner (batch) axis.
# --------------------------------------------------------------------------
def _bcast_add_kernel(x_ref, add_ref, o_ref):
    # x_ref / o_ref: (TB, D, TS)   add_ref: (D, TS)
    o_ref[...] = x_ref[...] + add_ref[...][None, :, :]


def _choose_tiles(B, D, S, max_block_bytes=2 * 1024 * 1024):
    """Pick (batch_tile, seq_tile).

    seq_tile: the largest power-of-two multiple of 128 that divides S and keeps
    a single (1, D, TS) f32 block under max_block_bytes (falls back to full S,
    which is always a legal block).  batch_tile: largest divisor of B that keeps
    the (TB, D, TS) block under max_block_bytes (fewer grid steps, larger DMAs).
    """
    if S % 128 == 0:
        ts, t = 128, 128
        while t <= S:
            if S % t == 0 and D * t * 4 <= max_block_bytes:
                ts = t
            t *= 2
    else:
        ts = S
    tb = 1
    for cand in range(1, B + 1):
        if B % cand == 0 and cand * D * ts * 4 <= max_block_bytes:
            tb = cand
    return tb, ts


def positional_embedding_forward(x_ncs, pe, w1, b1, w2, b2):
    """x_ncs: (B, D, S) float32 (PyTorch NCS layout). Returns (B, D, S).

    pe: (S, D), w1: (D, H), b1: (H,), w2: (H, D), b2: (D,).
    """
    B, D, S = x_ncs.shape
    H = w1.shape[1]

    # Tiny parameter reshapes/transposes only (no full-tensor x transposes).
    pe_t = jnp.transpose(pe)          # (D, S)
    w1_t = jnp.transpose(w1)          # (H, D)
    w2_t = jnp.transpose(w2)          # (D, H)
    b1_t = b1.reshape(H, 1)
    b2_t = b2.reshape(D, 1)

    # ---- Kernel A: one-shot FFN (x-independent) -> add_T (D, S) -----------
    add_t = pl.pallas_call(
        _ffn_kernel,
        out_shape=jax.ShapeDtypeStruct((D, S), jnp.float32),
        grid_spec=pltpu.PrefetchScalarGridSpec(
            num_scalar_prefetch=0,
            grid=(1,),
            in_specs=[
                pl.BlockSpec((D, S), lambda i: (0, 0)),   # pe^T
                pl.BlockSpec((H, D), lambda i: (0, 0)),   # w1^T
                pl.BlockSpec((H, 1), lambda i: (0, 0)),   # b1
                pl.BlockSpec((D, H), lambda i: (0, 0)),   # w2^T
                pl.BlockSpec((D, 1), lambda i: (0, 0)),   # b2
            ],
            out_specs=pl.BlockSpec((D, S), lambda i: (0, 0)),
        ),
        compiler_params=pltpu.CompilerParams(
            dimension_semantics=("arbitrary",)),
    )(pe_t, w1_t, b1_t, w2_t, b2_t)

    # ---- Kernel B: tiled, pipelined broadcast-add over (S tiles, B tiles) --
    tb, ts = _choose_tiles(B, D, S)
    n_s = S // ts
    n_b = B // tb

    bytes_accessed = (2 * B * D * S + D * S) * 4    # read x + write out + read add_T
    cost = pl.CostEstimate(flops=B * D * S, transcendentals=0,
                           bytes_accessed=bytes_accessed)

    out = pl.pallas_call(
        _bcast_add_kernel,
        out_shape=jax.ShapeDtypeStruct((B, D, S), x_ncs.dtype),
        grid_spec=pltpu.PrefetchScalarGridSpec(
            num_scalar_prefetch=0,
            # s is the outer axis, b the inner one -> add_T block index is
            # constant across the inner loop (no re-DMA of add_T per batch).
            grid=(n_s, n_b),
            in_specs=[
                pl.BlockSpec((tb, D, ts), lambda s, b: (b, 0, s)),   # x tile
                pl.BlockSpec((D, ts),     lambda s, b: (0, s)),      # add_T tile
            ],
            out_specs=pl.BlockSpec((tb, D, ts), lambda s, b: (b, 0, s)),
        ),
        compiler_params=pltpu.CompilerParams(
            dimension_semantics=("parallel", "parallel"),
            vmem_limit_bytes=32 * 1024 * 1024,
        ),
        cost_estimate=cost,
        input_output_aliases={0: 0},   # output may reuse x's HBM buffer
    )(x_ncs, add_t)

    return out                                              # (B, D, S)


def reference_forward(x_ncs, pe, w1, b1, w2, b2):
    """Pure-JAX reference mirroring the PyTorch module semantics."""
    x = jnp.transpose(x_ncs, (0, 2, 1))                     # (B, S, D)
    h = jnp.maximum(pe @ w1 + b1[None, :], 0.0)             # (S, H)
    add = h @ w2 + b2[None, :]                              # (S, D)
    x = x + add[None, :, :]
    return jnp.transpose(x, (0, 2, 1))                      # (B, D, S)


if __name__ == "__main__":
    # Small deterministic setup: batch=2, out_dim=32, ff_dim=64, seq_length=256
    B, S, D, H = 2, 256, 32, 64

    key = jax.random.PRNGKey(0)
    kx, k1, k2, k3, k4 = jax.random.split(key, 5)

    # Input in PyTorch layout (B, out_dim, seq_length)
    x = jax.random.normal(kx, (B, D, S), dtype=jnp.float32)

    # Fixed (non-trainable) positional encoding, shape (S, D)
    pe = jnp.asarray(positional_encoding(S, D))

    # Linear layer params (deterministic, PyTorch-like uniform init)
    lim1 = 1.0 / np.sqrt(D)
    lim2 = 1.0 / np.sqrt(H)
    w1 = jax.random.uniform(k1, (D, H), jnp.float32, -lim1, lim1)
    b1 = jax.random.uniform(k2, (H,), jnp.float32, -lim1, lim1)
    w2 = jax.random.uniform(k3, (H, D), jnp.float32, -lim2, lim2)
    b2 = jax.random.uniform(k4, (D,), jnp.float32, -lim2, lim2)

    # Reference computed (and blocked) first to guard against any aliasing.
    ref = jax.block_until_ready(reference_forward(x, pe, w1, b1, w2, b2))

    out = positional_embedding_forward(x, pe, w1, b1, w2, b2)
    out = jax.block_until_ready(out)

    np.testing.assert_allclose(np.asarray(out), np.asarray(ref),
                               rtol=1e-5, atol=1e-5)
    assert out.shape == (B, D, S)
    print("KERNEL_OK")
</pallas_src>

<mosaic_0001>
module attributes {stable_mosaic.version = 11 : i64} {
  func.func @_ffn_kernel(%arg0: i32, %arg1: memref<32x256xf32, #tpu.memory_space<vmem>>, %arg2: memref<64x32xf32, #tpu.memory_space<vmem>>, %arg3: memref<64x1xf32, #tpu.memory_space<vmem>>, %arg4: memref<32x64xf32, #tpu.memory_space<vmem>>, %arg5: memref<32x1xf32, #tpu.memory_space<vmem>>, %arg6: memref<32x256xf32, #tpu.memory_space<vmem>>) attributes {dimension_semantics = [#tpu.dimension_semantics<arbitrary>], iteration_bounds = array<i64: 1>, scalar_prefetch = 0 : i64, scratch_operands = 0 : i64, tpu.core_type = #tpu.core_type<tc>, window_params = [{pipeline_mode = #tpu.pipeline_mode<synchronous>, transform_indices = @transform_0, window_bounds = array<i64: 32, 256>}, {pipeline_mode = #tpu.pipeline_mode<synchronous>, transform_indices = @transform_1, window_bounds = array<i64: 64, 32>}, {pipeline_mode = #tpu.pipeline_mode<synchronous>, transform_indices = @transform_2, window_bounds = array<i64: 64, 1>}, {pipeline_mode = #tpu.pipeline_mode<synchronous>, transform_indices = @transform_3, window_bounds = array<i64: 32, 64>}, {pipeline_mode = #tpu.pipeline_mode<synchronous>, transform_indices = @transform_4, window_bounds = array<i64: 32, 1>}, {pipeline_mode = #tpu.pipeline_mode<synchronous>, transform_indices = @transform_5, window_bounds = array<i64: 32, 256>}]} {
    %c0 = arith.constant 0 : index
    %c0_0 = arith.constant 0 : index
    %0 = vector.load %arg2[%c0, %c0_0] : memref<64x32xf32, #tpu.memory_space<vmem>>, vector<64x32xf32>
    %c0_1 = arith.constant 0 : index
    %c0_2 = arith.constant 0 : index
    %1 = vector.load %arg1[%c0_1, %c0_2] : memref<32x256xf32, #tpu.memory_space<vmem>>, vector<32x256xf32>
    %cst = arith.constant dense<0.000000e+00> : vector<64x256xf32>
    %2 = tpu.matmul %0, %1, %cst {dimension_numbers = #tpu.dot_dimension_numbers<[1], [0], [0], [1], [0, 0, 1, 1], [], []>} : vector<64x32xf32>, vector<32x256xf32>, vector<64x256xf32> -> vector<64x256xf32>
    %c0_3 = arith.constant 0 : index
    %c0_4 = arith.constant 0 : index
    %3 = vector.load %arg3[%c0_3, %c0_4] : memref<64x1xf32, #tpu.memory_space<vmem>>, vector<64x1xf32>
    %4 = vector.broadcast %3 : vector<64x1xf32> to vector<64x256xf32>
    %5 = arith.addf %2, %4 : vector<64x256xf32>
    %cst_5 = arith.constant 0.000000e+00 : f32
    %6 = vector.broadcast %cst_5 : f32 to vector<64x256xf32>
    %7 = arith.maximumf %5, %6 : vector<64x256xf32>
    %c0_6 = arith.constant 0 : index
    %c0_7 = arith.constant 0 : index
    %8 = vector.load %arg4[%c0_6, %c0_7] : memref<32x64xf32, #tpu.memory_space<vmem>>, vector<32x64xf32>
    %cst_8 = arith.constant dense<0.000000e+00> : vector<32x256xf32>
    %9 = tpu.matmul %8, %7, %cst_8 {dimension_numbers = #tpu.dot_dimension_numbers<[1], [0], [0], [1], [0, 0, 1, 1], [], []>} : vector<32x64xf32>, vector<64x256xf32>, vector<32x256xf32> -> vector<32x256xf32>
    %c0_9 = arith.constant 0 : index
    %c0_10 = arith.constant 0 : index
    %10 = vector.load %arg5[%c0_9, %c0_10] : memref<32x1xf32, #tpu.memory_space<vmem>>, vector<32x1xf32>
    %11 = vector.broadcast %10 : vector<32x1xf32> to vector<32x256xf32>
    %12 = arith.addf %9, %11 : vector<32x256xf32>
    %c0_11 = arith.constant 0 : index
    %c0_12 = arith.constant 0 : index
    %13 = vector.load %arg6[%c0_11, %c0_12] : memref<32x256xf32, #tpu.memory_space<vmem>>, vector<32x256xf32>
    tpu.vector_store %arg6[%c0_11, %c0_12], %12 {strides = array<i32>} : memref<32x256xf32, #tpu.memory_space<vmem>>, vector<32x256xf32>,
    return
  }
  func.func @transform_0(%arg0: i32) -> (i32, i32) {
    %c0_i32 = arith.constant 0 : i32
    %c0_i32_0 = arith.constant 0 : i32
    %c0_i32_1 = arith.constant 0 : i32
    return %c0_i32, %c0_i32_0 : i32, i32
  }
  func.func @transform_1(%arg0: i32) -> (i32, i32) {
    %c0_i32 = arith.constant 0 : i32
    %c0_i32_0 = arith.constant 0 : i32
    %c0_i32_1 = arith.constant 0 : i32
    return %c0_i32, %c0_i32_0 : i32, i32
  }
  func.func @transform_2(%arg0: i32) -> (i32, i32) {
    %c0_i32 = arith.constant 0 : i32
    %c0_i32_0 = arith.constant 0 : i32
    %c0_i32_1 = arith.constant 0 : i32
    return %c0_i32, %c0_i32_0 : i32, i32
  }
  func.func @transform_3(%arg0: i32) -> (i32, i32) {
    %c0_i32 = arith.constant 0 : i32
    %c0_i32_0 = arith.constant 0 : i32
    %c0_i32_1 = arith.constant 0 : i32
    return %c0_i32, %c0_i32_0 : i32, i32
  }
  func.func @transform_4(%arg0: i32) -> (i32, i32) {
    %c0_i32 = arith.constant 0 : i32
    %c0_i32_0 = arith.constant 0 : i32
    %c0_i32_1 = arith.constant 0 : i32
    return %c0_i32, %c0_i32_0 : i32, i32
  }
  func.func @transform_5(%arg0: i32) -> (i32, i32) {
    %c0_i32 = arith.constant 0 : i32
    %c0_i32_0 = arith.constant 0 : i32
    %c0_i32_1 = arith.constant 0 : i32
    return %c0_i32, %c0_i32_0 : i32, i32
  }
}

</mosaic_0001>

<llo_original>
// kernel: tpu_custom_call.1
$region0: #{tpu_custom_call.1}
  #allocation0 [shape = 'u32[]', space=smem, size = 0x4, offset = 0x4, fixed_abs, tag = 'smem constant byte address 0x4 - core index']
  #allocation1 [shape = 'u32[144,128]{1,0:T(1,128)}', space=vmem, size = 0x12000, scoped, tag = 'internal scratch']
  %s0 = inlined_call_operand.vmem [shape: f32[32,256], index: 0, kind: input, shape index: {}]
  %s1 = inlined_call_operand.vmem [shape: f32[64,32], index: 1, kind: input, shape index: {}]
  %s2 = inlined_call_operand.vmem [shape: f32[64,1], index: 2, kind: input, shape index: {}]
  %s3 = inlined_call_operand.vmem [shape: f32[32,64], index: 3, kind: input, shape index: {}]
  %s4 = inlined_call_operand.vmem [shape: f32[32,1], index: 4, kind: input, shape index: {}]
  %s5 = inlined_call_operand.hbm [shape: f32[32,256], index: 5, kind: output, shape index: {}]
  %s6 = sld [smem:[#allocation0]]
  $region30: #{tpu_custom_call.1} parent=0
    _
  %s8 = ssub.s32 1, %s6
  %s9 = scalar_select 0, %s8, %s6
  $region1: #{tpu_custom_call.1} parent=0
    #allocation2 [shape = 'u8[32768]{0}', space=vmem, size = 0x8000, scoped, tag = 'output window, operand 0, single buffered']
    #allocation3 [shape = 's32[1]{0}', space=sflag, size = 0x4, scoped, tag = 'scoped memory for tpu_custom_call.1']
    %10 = vsyncpa [#allocation3], 0
    // Predicated region
    $region2: #{tpu_custom_call.1} parent=1 // pred_check
      _
    $region3: #{tpu_custom_call.1} parent=1 // pred_check_branch
      %12 = sbr.rel (0) target = $region5
    $region4: #{tpu_custom_call.1} parent=1 // pred_region
      _
    $region5: #{tpu_custom_call.1} parent=1 // pred_fallthru
      _
    // Predicated region
    $region6: #{tpu_custom_call.1} parent=1 // pred_check
      _
    $region7: #{tpu_custom_call.1} parent=1 // pred_check_branch
      %14 = sbr.rel (0) target = $region9
    $region8: #{tpu_custom_call.1} parent=1 // pred_region
      _
    $region9: #{tpu_custom_call.1} parent=1 // pred_fallthru
      _
    // Predicated region
    $region10: #{tpu_custom_call.1} parent=1 // pred_check
      _
    $region11: #{tpu_custom_call.1} parent=1 // pred_check_branch
      %16 = sbr.rel (0) target = $region13
    $region12: #{tpu_custom_call.1} parent=1 // pred_region
      _
    $region13: #{tpu_custom_call.1} parent=1 // pred_fallthru
      _
    // Predicated region
    $region14: #{tpu_custom_call.1} parent=1 // pred_check
      _
    $region15: #{tpu_custom_call.1} parent=1 // pred_check_branch
      %18 = sbr.rel (0) target = $region17
    $region16: #{tpu_custom_call.1} parent=1 // pred_region
      _
    $region17: #{tpu_custom_call.1} parent=1 // pred_fallthru
      _
    // Predicated region
    $region18: #{tpu_custom_call.1} parent=1 // pred_check
      _
    $region19: #{tpu_custom_call.1} parent=1 // pred_check_branch
      %20 = sbr.rel (0) target = $region21
    $region20: #{tpu_custom_call.1} parent=1 // pred_region
      _
    $region21: #{tpu_custom_call.1} parent=1 // pred_fallthru
      _
    %v21 = vld [vmem:[%s1] sm:$0xff]
    %v22 = vld [vmem:[%s1 + $0x8] sm:$0xff]
    %v23 = vld [vmem:[%s1 + $0x10] sm:$0xff]
    %v24 = vld [vmem:[%s1 + $0x18] sm:$0xff]
    %v25 = vld [vmem:[%s1 + $0x20] sm:$0xff]
    %v26 = vld [vmem:[%s1 + $0x28] sm:$0xff]
    %v27 = vld [vmem:[%s1 + $0x30] sm:$0xff]
    %v28 = vld [vmem:[%s1 + $0x38] sm:$0xff]
    %v29 = vld [vmem:[%s0] sm:$0xff]
    %v30 = vld [vmem:[%s0 + $0x8] sm:$0xff]
    %v31 = vld [vmem:[%s0 + $0x10] sm:$0xff]
    %v32 = vld [vmem:[%s0 + $0x18] sm:$0xff]
    %v33 = vld [vmem:[%s0 + $0x20] sm:$0xff]
    %v34 = vld [vmem:[%s0 + $0x28] sm:$0xff]
    %v35 = vld [vmem:[%s0 + $0x30] sm:$0xff]
    %v36 = vld [vmem:[%s0 + $0x38] sm:$0xff]
    %v37 = vld [vmem:[%s2] sm:$0xff]
    %v38 = vld [vmem:[%s2 + $0x8] sm:$0xff]
    %v39 = vld [vmem:[%s2 + $0x10] sm:$0xff]
    %v40 = vld [vmem:[%s2 + $0x18] sm:$0xff]
    %v41 = vld [vmem:[%s2 + $0x20] sm:$0xff]
    %v42 = vld [vmem:[%s2 + $0x28] sm:$0xff]
    %v43 = vld [vmem:[%s2 + $0x30] sm:$0xff]
    %v44 = vld [vmem:[%s2 + $0x38] sm:$0xff]
    %46 = vset.pattern.permute.xlu0 0
    %47 = vperm.xlu0 %46, %v37
    %v48 = vpop.permute.xlu0 %47
    %51 = vset.pattern.permute.xlu0 0
    %52 = vperm.xlu0 %51, %v38
    %v53 = vpop.permute.xlu0 %52
    %56 = vset.pattern.permute.xlu0 0
    %57 = vperm.xlu0 %56, %v39
    %v58 = vpop.permute.xlu0 %57
    %61 = vset.pattern.permute.xlu0 0
    %62 = vperm.xlu0 %61, %v40
    %v63 = vpop.permute.xlu0 %62
    %66 = vset.pattern.permute.xlu0 0
    %67 = vperm.xlu0 %66, %v41
    %v68 = vpop.permute.xlu0 %67
    %71 = vset.pattern.permute.xlu0 0
    %72 = vperm.xlu0 %71, %v42
    %v73 = vpop.permute.xlu0 %72
    %76 = vset.pattern.permute.xlu0 0
    %77 = vperm.xlu0 %76, %v43
    %v78 = vpop.permute.xlu0 %77
    %81 = vset.pattern.permute.xlu0 0
    %82 = vperm.xlu0 %81, %v44
    %v83 = vpop.permute.xlu0 %82
    %vm85 = vcmask 261120
    %v87 = vsel %vm85, %v21, 0
    %v90 = vsel %vm85, %v22, 0
    %v93 = vsel %vm85, %v23, 0
    %v96 = vsel %vm85, %v24, 0
    %v99 = vsel %vm85, %v25, 0
    %v102 = vsel %vm85, %v26, 0
    %v105 = vsel %vm85, %v27, 0
    %v108 = vsel %vm85, %v28, 0
    %110 = vmatprep.subr.mxu0 %v30
    %111 = vmatpush1.msra.mxu0 %v29
    %112 = vmatprep.subr.mxu0 %v32
    %113 = vmatpush1.msra.mxu0 %v31
    %114 = vmatprep.subr.mxu0 %v34
    %115 = vmatpush1.msra.mxu0 %v33
    %116 = vmatprep.subr.mxu0 %v36
    %117 = vmatpush1.msra.mxu0 %v35
    %118 = vmatprep.subr.mxu0 0.0
    %119 = vmatpush1.msra.mxu0 0.0
    %120 = vmatprep.subr.mxu0 0.0
    %121 = vmatpush1.msra.mxu0 0.0
    %122 = vmatprep.subr.mxu0 0.0
    %123 = vmatpush1.msra.mxu0 0.0
    %124 = vmatprep.subr.mxu0 0.0
    %125 = vmatpush1.msra.mxu0 0.0
    %126 = vmatprep.subr.mxu0 0.0
    %127 = vmatpush1.msra.mxu0 0.0
    %128 = vmatprep.subr.mxu0 0.0
    %129 = vmatpush1.msra.mxu0 0.0
    %130 = vmatprep.subr.mxu0 0.0
    %131 = vmatpush1.msra.mxu0 0.0
    %132 = vmatprep.subr.mxu0 0.0
    %133 = vmatpush1.msra.mxu0 0.0
    %134 = vmatprep.subr.mxu0 0.0
    %135 = vmatpush1.msra.mxu0 0.0
    %136 = vmatprep.subr.mxu0 0.0
    %137 = vmatpush1.msra.mxu0 0.0
    %138 = vmatprep.subr.mxu0 0.0
    %139 = vmatpush1.msra.mxu0 0.0
    %140 = vmatprep.subr.mxu0 0.0
    %141 = vmatpush1.msra.mxu0 0.0
    %142 = vmatprep.subr.mxu0 0.0
    %143 = vmatpush1.msra.mxu0 0.0
    %144 = vmatprep.subr.mxu0 0.0
    %145 = vmatpush1.msra.mxu0 0.0
    %146 = vmatprep.subr.mxu0 0.0
    %147 = vmatpush1.msra.mxu0 0.0
    %148 = vmatprep.subr.mxu0 0.0
    %149 = vmatpush1.msra.mxu0 0.0
    %150 = vmatprep.subr.mxu0 0.0
    %151 = vmatpush1.msra.mxu0 0.0
    %152 = vmatprep.subr.mxu0 0.0
    %153 = vmatpush1.msra.mxu0 0.0
    %154 = vmatprep.subr.mxu0 0.0
    %155 = vmatpush1.msra.mxu0 0.0
    %156 = vmatprep.subr.mxu0 0.0
    %157 = vmatpush1.msra.mxu0 0.0
    %158 = vmatprep.subr.mxu0 0.0
    %159 = vmatpush1.msra.mxu0 0.0
    %160 = vmatprep.subr.mxu0 0.0
    %161 = vmatpush1.msra.mxu0 0.0
    %162 = vmatprep.subr.mxu0 0.0
    %163 = vmatpush1.msra.mxu0 0.0
    %164 = vmatprep.subr.mxu0 0.0
    %165 = vmatpush1.msra.mxu0 0.0
    %166 = vmatprep.subr.mxu0 0.0
    %167 = vmatpush1.msra.mxu0 0.0
    %168 = vmatprep.subr.mxu0 0.0
    %169 = vmatpush1.msra.mxu0 0.0
    %170 = vmatprep.subr.mxu0 0.0
    %171 = vmatpush1.msra.mxu0 0.0
    %172 = vmatprep.subr.mxu0 0.0
    %173 = vmatpush1.msra.mxu0 0.0
    %174 = vmatprep.mubr.f32.mxu0 0.0
    %175 = vmatmul.mubr.f32.gmra.mrb[0].mxu0 %v87
    %v176 = vpop.f32.mrb[0].mxu0
    %v177 = vadd.f32 %v48, %v176
    %v178 = vpop.f32.mrb[0].mxu0
    %v179 = vadd.f32 %v48, %v178
    %180 = vmatprep.mubr.f32.mxu0 0.0
    %181 = vmatmul.mubr.f32.gmra.mrb[0].mxu0 %v90
    %v182 = vpop.f32.mrb[0].mxu0
    %v183 = vadd.f32 %v53, %v182
    %v184 = vpop.f32.mrb[0].mxu0
    %v185 = vadd.f32 %v53, %v184
    %186 = vmatprep.mubr.f32.mxu0 0.0
    %187 = vmatmul.mubr.f32.gmra.mrb[0].mxu0 %v93
    %v188 = vpop.f32.mrb[0].mxu0
    %v189 = vadd.f32 %v58, %v188
    %v190 = vpop.f32.mrb[0].mxu0
    %v191 = vadd.f32 %v58, %v190
    %192 = vmatprep.mubr.f32.mxu0 0.0
    %193 = vmatmul.mubr.f32.gmra.mrb[0].mxu0 %v96
    %v194 = vpop.f32.mrb[0].mxu0
    %v195 = vadd.f32 %v63, %v194
    %v196 = vpop.f32.mrb[0].mxu0
    %v197 = vadd.f32 %v63, %v196
    %198 = vmatprep.mubr.f32.mxu0 0.0
    %199 = vmatmul.mubr.f32.gmra.mrb[0].mxu0 %v99
    %v200 = vpop.f32.mrb[0].mxu0
    %v201 = vadd.f32 %v68, %v200
    %v202 = vpop.f32.mrb[0].mxu0
    %v203 = vadd.f32 %v68, %v202
    %204 = vmatprep.mubr.f32.mxu0 0.0
    %205 = vmatmul.mubr.f32.gmra.mrb[0].mxu0 %v102
    %v206 = vpop.f32.mrb[0].mxu0
    %v207 = vadd.f32 %v73, %v206
    %v208 = vpop.f32.mrb[0].mxu0
    %v209 = vadd.f32 %v73, %v208
    %210 = vmatprep.mubr.f32.mxu0 0.0
    %211 = vmatmul.mubr.f32.gmra.mrb[0].mxu0 %v105
    %v212 = vpop.f32.mrb[0].mxu0
    %v213 = vadd.f32 %v78, %v212
    %v214 = vpop.f32.mrb[0].mxu0
    %v215 = vadd.f32 %v78, %v214
    %216 = vmatprep.mubr.f32.mxu0 0.0
    %217 = vmatmul.mubr.f32.gmra.mrb[0].mxu0 %v108
    %v218 = vpop.f32.mrb[0].mxu0
    %v219 = vadd.f32 %v83, %v218
    %v220 = vpop.f32.mrb[0].mxu0
    %v221 = vadd.f32 %v83, %v220
    %222 = vdwg.mxu0
    %v223 = vmax.f32 %v177, 0.0
    %v224 = vmax.f32 %v179, 0.0
    %v225 = vmax.f32 %v183, 0.0
    %v226 = vmax.f32 %v185, 0.0
    %v227 = vmax.f32 %v189, 0.0
    %v228 = vmax.f32 %v191, 0.0
    %v229 = vmax.f32 %v195, 0.0
    %v230 = vmax.f32 %v197, 0.0
    %v231 = vmax.f32 %v201, 0.0
    %v232 = vmax.f32 %v203, 0.0
    %v233 = vmax.f32 %v207, 0.0
    %v234 = vmax.f32 %v209, 0.0
    %v235 = vmax.f32 %v213, 0.0
    %v236 = vmax.f32 %v215, 0.0
    %v237 = vmax.f32 %v219, 0.0
    %v238 = vmax.f32 %v221, 0.0
    %v239 = vld [vmem:[%s3] sm:$0xff]
    %v240 = vld [vmem:[%s3 + $0x8] sm:$0xff]
    %v241 = vld [vmem:[%s3 + $0x10] sm:$0xff]
    %v242 = vld [vmem:[%s3 + $0x18] sm:$0xff]
    %v243 = vld [vmem:[%s4] sm:$0xff]
    %v244 = vld [vmem:[%s4 + $0x8] sm:$0xff]
    %v245 = vld [vmem:[%s4 + $0x10] sm:$0xff]
    %v246 = vld [vmem:[%s4 + $0x18] sm:$0xff]
    %248 = vset.pattern.permute.xlu0 0
    %249 = vperm.xlu0 %248, %v243
    %v250 = vpop.permute.xlu0 %249
    %253 = vset.pattern.permute.xlu0 0
    %254 = vperm.xlu0 %253, %v244
    %v255 = vpop.permute.xlu0 %254
    %258 = vset.pattern.permute.xlu0 0
    %259 = vperm.xlu0 %258, %v245
    %v260 = vpop.permute.xlu0 %259
    %263 = vset.pattern.permute.xlu0 0
    %264 = vperm.xlu0 %263, %v246
    %v265 = vpop.permute.xlu0 %264
    %vm267 = vcmask 523264
    %v269 = vsel %vm267, %v239, 0
    %v272 = vsel %vm267, %v240, 0
    %v275 = vsel %vm267, %v241, 0
    %v278 = vsel %vm267, %v242, 0
    %280 = vmatprep.subr.mxu0 %v224
    %281 = vmatpush1.msra.mxu0 %v223
    %282 = vmatprep.subr.mxu0 %v226
    %283 = vmatpush1.msra.mxu0 %v225
    %284 = vmatprep.subr.mxu0 %v228
    %285 = vmatpush1.msra.mxu0 %v227
    %286 = vmatprep.subr.mxu0 %v230
    %287 = vmatpush1.msra.mxu0 %v229
    %288 = vmatprep.subr.mxu0 %v232
    %289 = vmatpush1.msra.mxu0 %v231
    %290 = vmatprep.subr.mxu0 %v234
    %291 = vmatpush1.msra.mxu0 %v233
    %292 = vmatprep.subr.mxu0 %v236
    %293 = vmatpush1.msra.mxu0 %v235
    %294 = vmatprep.subr.mxu0 %v238
    %295 = vmatpush1.msra.mxu0 %v237
    %296 = vmatprep.subr.mxu0 0.0
    %297 = vmatpush1.msra.mxu0 0.0
    %298 = vmatprep.subr.mxu0 0.0
    %299 = vmatpush1.msra.mxu0 0.0
    %300 = vmatprep.subr.mxu0 0.0
    %301 = vmatpush1.msra.mxu0 0.0
    %302 = vmatprep.subr.mxu0 0.0
    %303 = vmatpush1.msra.mxu0 0.0
    %304 = vmatprep.subr.mxu0 0.0
    %305 = vmatpush1.msra.mxu0 0.0
    %306 = vmatprep.subr.mxu0 0.0
    %307 = vmatpush1.msra.mxu0 0.0
    %308 = vmatprep.subr.mxu0 0.0
    %309 = vmatpush1.msra.mxu0 0.0
    %310 = vmatprep.subr.mxu0 0.0
    %311 = vmatpush1.msra.mxu0 0.0
    %312 = vmatprep.subr.mxu0 0.0
    %313 = vmatpush1.msra.mxu0 0.0
    %314 = vmatprep.subr.mxu0 0.0
    %315 = vmatpush1.msra.mxu0 0.0
    %316 = vmatprep.subr.mxu0 0.0
    %317 = vmatpush1.msra.mxu0 0.0
    %318 = vmatprep.subr.mxu0 0.0
    %319 = vmatpush1.msra.mxu0 0.0
    %320 = vmatprep.subr.mxu0 0.0
    %321 = vmatpush1.msra.mxu0 0.0
    %322 = vmatprep.subr.mxu0 0.0
    %323 = vmatpush1.msra.mxu0 0.0
    %324 = vmatprep.subr.mxu0 0.0
    %325 = vmatpush1.msra.mxu0 0.0
    %326 = vmatprep.subr.mxu0 0.0
    %327 = vmatpush1.msra.mxu0 0.0
    %328 = vmatprep.subr.mxu0 0.0
    %329 = vmatpush1.msra.mxu0 0.0
    %330 = vmatprep.subr.mxu0 0.0
    %331 = vmatpush1.msra.mxu0 0.0
    %332 = vmatprep.subr.mxu0 0.0
    %333 = vmatpush1.msra.mxu0 0.0
    %334 = vmatprep.subr.mxu0 0.0
    %335 = vmatpush1.msra.mxu0 0.0
    %336 = vmatprep.subr.mxu0 0.0
    %337 = vmatpush1.msra.mxu0 0.0
    %338 = vmatprep.subr.mxu0 0.0
    %339 = vmatpush1.msra.mxu0 0.0
    %340 = vmatprep.subr.mxu0 0.0
    %341 = vmatpush1.msra.mxu0 0.0
    %342 = vmatprep.subr.mxu0 0.0
    %343 = vmatpush1.msra.mxu0 0.0
    %344 = vmatprep.mubr.f32.mxu0 0.0
    %345 = vmatmul.mubr.f32.gmra.mrb[0].mxu0 %v269
    %v346 = vpop.f32.mrb[0].mxu0
    %v347 = vadd.f32 %v250, %v346
    %v348 = vpop.f32.mrb[0].mxu0
    %v349 = vadd.f32 %v250, %v348
    %350 = vmatprep.mubr.f32.mxu0 0.0
    %351 = vmatmul.mubr.f32.gmra.mrb[0].mxu0 %v272
    %v352 = vpop.f32.mrb[0].mxu0
    %v353 = vadd.f32 %v255, %v352
    %v354 = vpop.f32.mrb[0].mxu0
    %v355 = vadd.f32 %v255, %v354
    %356 = vmatprep.mubr.f32.mxu0 0.0
    %357 = vmatmul.mubr.f32.gmra.mrb[0].mxu0 %v275
    %v358 = vpop.f32.mrb[0].mxu0
    %v359 = vadd.f32 %v260, %v358
    %v360 = vpop.f32.mrb[0].mxu0
    %v361 = vadd.f32 %v260, %v360
    %362 = vmatprep.mubr.f32.mxu0 0.0
    %363 = vmatmul.mubr.f32.gmra.mrb[0].mxu0 %v278
    %v364 = vpop.f32.mrb[0].mxu0
    %v365 = vadd.f32 %v265, %v364
    %v366 = vpop.f32.mrb[0].mxu0
    %v367 = vadd.f32 %v265, %v366
    %368 = vdwg.mxu0
    %369 = vst [vmem:[#allocation2] sm:$0xff] %v347
    %370 = vst [vmem:[#allocation2 + $0x8] sm:$0xff] %v349
    %371 = vst [vmem:[#allocation2 + $0x10] sm:$0xff] %v353
    %372 = vst [vmem:[#allocation2 + $0x18] sm:$0xff] %v355
    %373 = vst [vmem:[#allocation2 + $0x20] sm:$0xff] %v359
    %374 = vst [vmem:[#allocation2 + $0x28] sm:$0xff] %v361
    %375 = vst [vmem:[#allocation2 + $0x30] sm:$0xff] %v365
    %376 = vst [vmem:[#allocation2 + $0x38] sm:$0xff] %v367
    // Predicated region
    $region22: #{tpu_custom_call.1} parent=1 // pred_check
      _
    $region23: #{tpu_custom_call.1} parent=1 // pred_check_branch
      %378 = sbr.rel (0) target = $region25
    $region24: #{tpu_custom_call.1} parent=1 // pred_region
      %s380 = ssub.s32 1024, 1024
      %381 = vsyncadd [#allocation3], %s380
      %s382 = sshll.u32 [#allocation2], 4
      %s383 = int_to_ptr.vmem [resolvable:$true] %s382
      %388 = dma.vmem_to_hbm [thread:$0]  %s383, 1024, %s5, [#allocation3], 256, 256, 16
    $region25: #{tpu_custom_call.1} parent=1 // pred_fallthru
      _
    // Predicated region
    $region26: #{tpu_custom_call.1} parent=1 // pred_check
      _
    $region27: #{tpu_custom_call.1} parent=1 // pred_check_branch
      %390 = sbr.rel (0) target = $region29
    $region28: #{tpu_custom_call.1} parent=1 // pred_region
      %391 = dma.done [#allocation3], 1024
    $region29: #{tpu_custom_call.1} parent=1 // pred_fallthru
      _
    %392 = vsyncpa [#allocation3], 1

</llo_original>
